<compile_context>
chip_gen: v6e
topology: v6e:2x2x1
jax: 0.10.0
libtpu: 0.0.40
codegen_flags: <defaults>
</compile_context>

<pallas_src>
import functools

import jax
import jax.numpy as jnp
from jax.experimental import pallas as pl
from jax.experimental.pallas import tpu as pltpu

NR_MODELS = 6      # nr_models in the reference
IN_CHANNELS = 3    # in_channels in the reference
HIDDEN = 32        # SimpleAutoencoder hidden width (surrogate)
CLASSES = 1        # classes in the reference

CHUNK = 512        # lanes processed per inner-loop iteration (kept in vregs)

# ---- packed-parameter layout inside a single (40, 128) f32 block ----------
#   rows 0:6,  cols 0:3   -> wm   (6, 3)   ensemble 1x1-conv weights
#   rows 0:6,  cols 4:5   -> bm   (6, 1)   ensemble biases
#   rows 0:1,  cols 6:7   -> b2   (1, 1)   decoder bias
#   rows 8:40, cols 0:6   -> w1   (32, 6)  encoder weights
#   rows 8:40, cols 8:9   -> b1   (32, 1)  encoder bias
#   rows 8:40, cols 10:11 -> w2^T (32, 1)  decoder weights (transposed)
PACK_ROWS = 8 + HIDDEN   # 40, multiple of 8
PACK_LANES = 128


def street_artist_kernel(x_ref, p_ref, o_ref, *, chunk):
    # x_ref: (1, C_in, TILE)  -- pixels on lanes, channels on sublanes
    # p_ref: (40, 128)        -- packed weights/biases (resident, constant block)
    # o_ref: (1, 1, TILE)
    p = p_ref[...]
    wm = p[0:NR_MODELS, 0:IN_CHANNELS]            # (6, 3)
    bm = p[0:NR_MODELS, 4:5]                      # (6, 1)
    b2 = p[0:1, 6:7]                              # (1, 1)
    w1 = p[8:8 + HIDDEN, 0:NR_MODELS]             # (32, 6)
    b1 = p[8:8 + HIDDEN, 8:9]                     # (32, 1)
    w2t = p[8:8 + HIDDEN, 10:11]                  # (32, 1) == w2.T

    n_chunks = x_ref.shape[-1] // chunk

    def body(c, carry):
        off = pl.multiple_of(c * chunk, chunk)
        x = x_ref[0, :, pl.ds(off, chunk)]        # (3, chunk) f32, no casts

        # --- ensemble: six 1x1-conv surrogates + sigmoid (MXU) ---
        m = jax.nn.sigmoid(
            jnp.dot(wm, x, preferred_element_type=jnp.float32) + bm)      # (6, chunk)

        # --- SimpleAutoencoder encoder: 6 -> 32, ReLU (MXU) ---
        h = jnp.maximum(
            jnp.dot(w1, m, preferred_element_type=jnp.float32) + b1, 0.0)  # (32, chunk)

        # --- decoder: 32 -> 1, sigmoid.  Degenerate 1-row matmul moved off
        #     the MXU onto VPU multiply + XLU sublane-reduce. ---
        y = jax.nn.sigmoid(jnp.sum(w2t * h, axis=0, keepdims=True) + b2)   # (1, chunk)

        o_ref[0, :, pl.ds(off, chunk)] = y.astype(o_ref.dtype)
        return carry

    jax.lax.fori_loop(0, n_chunks, body, None, unroll=True)


def init_params(key):
    ks = jax.random.split(key, 4)
    # Weights are stored pre-transposed for the pixels-on-lanes layout.
    wm = jax.random.normal(ks[0], (NR_MODELS, IN_CHANNELS), jnp.float32) * 0.5
    bm = jax.random.normal(ks[1], (NR_MODELS, 1), jnp.float32) * 0.1
    w1 = jax.random.normal(ks[2], (HIDDEN, NR_MODELS), jnp.float32) / (NR_MODELS ** 0.5)
    b1 = jnp.zeros((HIDDEN, 1), jnp.float32)
    w2 = jax.random.normal(ks[3], (CLASSES, HIDDEN), jnp.float32) / (HIDDEN ** 0.5)
    b2 = jnp.zeros((CLASSES, 1), jnp.float32)
    return wm, bm, w1, b1, w2, b2


def pack_params(params):
    """Pack all weights/biases into a single (8,128)-aligned f32 block."""
    wm, bm, w1, b1, w2, b2 = params
    p = jnp.zeros((PACK_ROWS, PACK_LANES), jnp.float32)
    p = p.at[0:NR_MODELS, 0:IN_CHANNELS].set(wm)
    p = p.at[0:NR_MODELS, 4:5].set(bm)
    p = p.at[0:1, 6:7].set(b2)
    p = p.at[8:8 + HIDDEN, 0:NR_MODELS].set(w1)
    p = p.at[8:8 + HIDDEN, 8:9].set(b1)
    p = p.at[8:8 + HIDDEN, 10:11].set(w2.T)
    return p


def _round_up(x, m):
    return ((x + m - 1) // m) * m


def street_artist_forward(x_nchw, params, *, tile_n=8192):
    """x_nchw: (B, C_in, H, W) float32 -> (B, 1, H, W) float32 in [0, 1]."""
    B, C, H, W = x_nchw.shape
    assert C == IN_CHANNELS
    HW = H * W

    # Lane-dense tiling at any resolution: tile is a multiple of CHUNK and the
    # pixel axis is padded up to a multiple of the tile (no giant fallback
    # blocks, no divisibility constraint on H*W).
    tile_cap = max(CHUNK, (tile_n // CHUNK) * CHUNK)
    tile = min(tile_cap, _round_up(HW, CHUNK))
    hw_pad = _round_up(HW, tile)

    # Free, contiguous reshape (no transpose): channels stay on sublanes,
    # pixels on lanes.
    x = x_nchw.reshape(B, C, HW)
    if hw_pad != HW:
        x = jnp.pad(x, ((0, 0), (0, 0), (0, hw_pad - HW)))

    packed = pack_params(params)
    kernel = functools.partial(street_artist_kernel, chunk=CHUNK)

    out = pl.pallas_call(
        kernel,
        out_shape=jax.ShapeDtypeStruct((B, CLASSES, hw_pad), x_nchw.dtype),
        grid=(B, hw_pad // tile),
        in_specs=[
            pl.BlockSpec((1, C, tile), lambda b, i: (b, 0, i)),      # pixel tiles
            pl.BlockSpec((PACK_ROWS, PACK_LANES), lambda b, i: (0, 0)),  # params
        ],
        out_specs=pl.BlockSpec((1, CLASSES, tile), lambda b, i: (b, 0, i)),
        compiler_params=pltpu.CompilerParams(
            dimension_semantics=("parallel", "parallel")),
    )(x, packed)

    if hw_pad != HW:
        out = out[:, :, :HW]
    # Free reshape back to NCHW.
    return out.reshape(B, CLASSES, H, W)


def _reference(x_nchw, params):
    """Plain-JAX reference for a sanity check."""
    wm, bm, w1, b1, w2, b2 = params
    B, C, H, W = x_nchw.shape
    x = x_nchw.reshape(B, C, H * W)
    m = jax.nn.sigmoid(jnp.einsum('mc,bcp->bmp', wm, x) + bm)
    h = jnp.maximum(jnp.einsum('hm,bmp->bhp', w1, m) + b1, 0.0)
    y = jax.nn.sigmoid(jnp.einsum('oh,bhp->bop', w2, h) + b2)
    return y.reshape(B, CLASSES, H, W)


if __name__ == "__main__":
    key = jax.random.PRNGKey(0)
    kx, kp = jax.random.split(key)
    # small NCHW input consistent with the module: batch=2, in_channels=3, 16x16
    x = jax.random.normal(kx, (2, IN_CHANNELS, 16, 16), jnp.float32)
    params = init_params(kp)

    ref = _reference(x, params)

    out = jax.block_until_ready(street_artist_forward(x, params))
    assert out.shape == (2, CLASSES, 16, 16)
    assert jnp.allclose(out, ref, atol=1e-4, rtol=1e-4)

    # non-divisible spatial size exercises the padded-tile path
    x_odd = jax.random.normal(kx, (2, IN_CHANNELS, 17, 19), jnp.float32)
    out_odd = jax.block_until_ready(street_artist_forward(x_odd, params))
    assert out_odd.shape == (2, CLASSES, 17, 19)
    assert jnp.allclose(out_odd, _reference(x_odd, params), atol=1e-4, rtol=1e-4)

    print("KERNEL_OK")
</pallas_src>

<mosaic_0001>
module attributes {stable_mosaic.version = 11 : i64} {
  func.func @street_artist_kernel(%arg0: i32, %arg1: i32, %arg2: memref<1x3x512xf32, #tpu.memory_space<vmem>>, %arg3: memref<40x128xf32, #tpu.memory_space<vmem>>, %arg4: memref<1x1x512xf32, #tpu.memory_space<vmem>>) attributes {dimension_semantics = [#tpu.dimension_semantics<parallel>, #tpu.dimension_semantics<parallel>], iteration_bounds = array<i64: 2, 1>, scalar_prefetch = 0 : i64, scratch_operands = 0 : i64, tpu.core_type = #tpu.core_type<tc>, window_params = [{transform_indices = @transform_0, window_bounds = array<i64: 1, 3, 512>}, {pipeline_mode = #tpu.pipeline_mode<synchronous>, transform_indices = @transform_1, window_bounds = array<i64: 40, 128>}, {transform_indices = @transform_2, window_bounds = array<i64: 1, 1, 512>}]} {
    %c0 = arith.constant 0 : index
    %c0_0 = arith.constant 0 : index
    %0 = vector.load %arg3[%c0, %c0_0] : memref<40x128xf32, #tpu.memory_space<vmem>>, vector<40x128xf32>
    %1 = vector.extract_strided_slice %0 {offsets = [0, 0], sizes = [6, 3], strides = [1, 1]} : vector<40x128xf32> to vector<6x3xf32>
    %2 = vector.extract_strided_slice %0 {offsets = [0, 4], sizes = [6, 1], strides = [1, 1]} : vector<40x128xf32> to vector<6x1xf32>
    %3 = vector.extract_strided_slice %0 {offsets = [0, 6], sizes = [1, 1], strides = [1, 1]} : vector<40x128xf32> to vector<1x1xf32>
    %4 = vector.extract_strided_slice %0 {offsets = [8, 0], sizes = [32, 6], strides = [1, 1]} : vector<40x128xf32> to vector<32x6xf32>
    %5 = vector.extract_strided_slice %0 {offsets = [8, 8], sizes = [32, 1], strides = [1, 1]} : vector<40x128xf32> to vector<32x1xf32>
    %6 = vector.extract_strided_slice %0 {offsets = [8, 10], sizes = [32, 1], strides = [1, 1]} : vector<40x128xf32> to vector<32x1xf32>
    %c0_i32 = arith.constant 0 : i32
    %c512_i32 = arith.constant 512 : i32
    %7 = arith.muli %c0_i32, %c512_i32 : i32
    %8 = tpu.assume_multiple %7, 512 : i32
    %c0_1 = arith.constant 0 : index
    %c0_2 = arith.constant 0 : index
    %9 = arith.index_cast %8 : i32 to index
    %10 = vector.load %arg2[%c0_1, %c0_2, %9] : memref<1x3x512xf32, #tpu.memory_space<vmem>>, vector<1x3x512xf32>
    %11 = vector.shape_cast %10 : vector<1x3x512xf32> to vector<3x512xf32>
    %cst = arith.constant dense<0.000000e+00> : vector<6x512xf32>
    %12 = tpu.matmul %1, %11, %cst {dimension_numbers = #tpu.dot_dimension_numbers<[1], [0], [0], [1], [0, 0, 1, 1], [], []>} : vector<6x3xf32>, vector<3x512xf32>, vector<6x512xf32> -> vector<6x512xf32>
    %13 = vector.broadcast %2 : vector<6x1xf32> to vector<6x512xf32>
    %14 = arith.addf %12, %13 : vector<6x512xf32>
    %15 = arith.negf %14 : vector<6x512xf32>
    %16 = math.exp %15 : vector<6x512xf32>
    %cst_3 = arith.constant 1.000000e+00 : f32
    %17 = vector.broadcast %cst_3 : f32 to vector<6x512xf32>
    %18 = arith.addf %17, %16 : vector<6x512xf32>
    %19 = arith.divf %17, %18 : vector<6x512xf32>
    %cst_4 = arith.constant dense<0.000000e+00> : vector<32x512xf32>
    %20 = tpu.matmul %4, %19, %cst_4 {dimension_numbers = #tpu.dot_dimension_numbers<[1], [0], [0], [1], [0, 0, 1, 1], [], []>} : vector<32x6xf32>, vector<6x512xf32>, vector<32x512xf32> -> vector<32x512xf32>
    %21 = vector.broadcast %5 : vector<32x1xf32> to vector<32x512xf32>
    %22 = arith.addf %20, %21 : vector<32x512xf32>
    %cst_5 = arith.constant 0.000000e+00 : f32
    %23 = vector.broadcast %cst_5 : f32 to vector<32x512xf32>
    %24 = arith.maximumf %22, %23 : vector<32x512xf32>
    %25 = vector.broadcast %6 : vector<32x1xf32> to vector<32x512xf32>
    %26 = arith.mulf %25, %24 : vector<32x512xf32>
    %cst_6 = arith.constant dense<0.000000e+00> : vector<512xf32>
    %27 = vector.multi_reduction <add>, %26, %cst_6 [0] : vector<32x512xf32> to vector<512xf32>
    %28 = vector.shape_cast %27 : vector<512xf32> to vector<1x512xf32>
    %29 = vector.broadcast %3 : vector<1x1xf32> to vector<1x512xf32>
    %30 = arith.addf %28, %29 : vector<1x512xf32>
    %31 = arith.negf %30 : vector<1x512xf32>
    %32 = math.exp %31 : vector<1x512xf32>
    %cst_7 = arith.constant 1.000000e+00 : f32
    %33 = vector.broadcast %cst_7 : f32 to vector<1x512xf32>
    %34 = arith.addf %33, %32 : vector<1x512xf32>
    %35 = arith.divf %33, %34 : vector<1x512xf32>
    %c0_8 = arith.constant 0 : index
    %c0_9 = arith.constant 0 : index
    %36 = arith.index_cast %8 : i32 to index
    %37 = vector.load %arg4[%c0_8, %c0_9, %36] : memref<1x1x512xf32, #tpu.memory_space<vmem>>, vector<1x1x512xf32>
    %38 = vector.shape_cast %37 : vector<1x1x512xf32> to vector<1x512xf32>
    %39 = vector.shape_cast %35 : vector<1x512xf32> to vector<1x1x512xf32>
    tpu.vector_store %arg4[%c0_8, %c0_9, %36], %39 {strides = array<i32>} : memref<1x1x512xf32, #tpu.memory_space<vmem>>, vector<1x1x512xf32>,
    %c1_i32 = arith.constant 1 : i32
    return
  }
  func.func @transform_0(%arg0: i32, %arg1: i32) -> (i32, i32, i32) {
    %c0_i32 = arith.constant 0 : i32
    %c0_i32_0 = arith.constant 0 : i32
    return %arg0, %c0_i32, %arg1 : i32, i32, i32
  }
  func.func @transform_1(%arg0: i32, %arg1: i32) -> (i32, i32) {
    %c0_i32 = arith.constant 0 : i32
    %c0_i32_0 = arith.constant 0 : i32
    %c0_i32_1 = arith.constant 0 : i32
    return %c0_i32, %c0_i32_0 : i32, i32
  }
  func.func @transform_2(%arg0: i32, %arg1: i32) -> (i32, i32, i32) {
    %c0_i32 = arith.constant 0 : i32
    %c0_i32_0 = arith.constant 0 : i32
    return %arg0, %c0_i32, %arg1 : i32, i32, i32
  }
}

</mosaic_0001>

<llo_original>
// kernel: tpu_custom_call.1
$region0: #{tpu_custom_call.1}
  #allocation0 [shape = 'u32[]', space=smem, size = 0x4, offset = 0x4, fixed_abs, tag = 'smem constant byte address 0x4 - core index']
  #allocation1 [shape = 'u32[144,128]{1,0:T(1,128)}', space=vmem, size = 0x12000, scoped, tag = 'internal scratch']
  %s0 = inlined_call_operand.vmem [shape: f32[2,3,512], index: 0, kind: input, shape index: {}]
  %s1 = inlined_call_operand.vmem [shape: f32[40,128], index: 1, kind: input, shape index: {}]
  %s2 = inlined_call_operand.hbm [shape: f32[2,1,512], index: 2, kind: output, shape index: {}]
  %s3 = sld [smem:[#allocation0]]
  $region41: #{tpu_custom_call.1} parent=0
    _
  %s5 = ssub.s32 1, %s3
  %s6 = scalar_select 0, %s5, %s3
  $region1: #{tpu_custom_call.1} parent=0
    #allocation2 [shape = 'u8[4096]{0}', space=vmem, size = 0x1000, scoped, tag = 'output window, operand 0']
    #allocation3 [shape = 's32[2]{0}', space=sflag, size = 0x8, scoped, tag = 'scoped memory for tpu_custom_call.1']
    %7 = vsyncpa [#allocation3], 0
    %s8 = scalar_lea.sflag [#allocation3], 1
    %9 = vsyncpa %s8, 0
    loop: start=0, step=1, limit=4
    $region2: #{tpu_custom_call.1} parent=1 // loop_pre_header
      _
    $region3: #{tpu_custom_call.1} parent=1 // loop_header
      %s11 = sphi 0, %s15
      %p12 = scmp.ge.s32.totalorder %s11, 4
      %s18 = sphi 0, %s30
      %s19 = sphi 0, %s26
      %s20 = sphi 0, %s18
      %s21 = sphi 0, %s19
      %s22 = sphi 0, %s20
      %s23 = sphi 0, %s21
      %s35 = sphi 0, %s37
      %s38 = sphi 0, %s35
      %s39 = sphi 0, %s38
      %s55 = sphi 0, %s39
      %s59 = sphi 0, %s59
      %s61 = sphi 0, %s59
      %s62 = sphi 0, %s61
      %s76 = sphi 0, %s62
      %s84 = sphi 0, %s86
      %s87 = sphi 0, %s84
      %s88 = sphi 0, %s87
      %s104 = sphi 0, %s88
    $region4: #{tpu_custom_call.1} parent=1 // loop_header_branch
      %14 = sbr.rel (%p12) target = $region8
    $region5: #{tpu_custom_call.1} parent=1 // loop_body
      %s16 = ssub.s32 %s11, 1
      %s17 = ssub.s32 %s11, 2
      %s24 = sadd.s32 1, %s19
      %p25 = scmp.ge.s32.totalorder %s24, 1
      %s26 = scalar_select %p25, 0, %s24
      %s27 = sadd.s32 1, %s18
      %s28 = scalar_select %p25, %s27, %s18
      %p29 = scmp.ge.s32.totalorder %s28, 2
      %s30 = scalar_select %p29, 0, %s28
      %s31 = ssub.s32 %s18, %s30
      %s32 = ssub.s32 %s19, %s26
      %s33 = sor.u32 %s31, %s32
      %p34 = scmp.eq.s32.totalorder %s33, 0
      %s36 = sadd.s32 %s35, 1
      %s37 = scalar_select %p34, %s35, %s36
      %p40 = pneg %p34
      %p41 = scmp.eq.s32.totalorder %s11, 1
      %p42 = por %p40, %p41
      %p43 = scmp.ne.s32.totalorder %s35, %s38
      %p44 = scmp.eq.s32.totalorder %s11, 0
      %p45 = por %p43, %p44
      %p46 = scmp.ne.s32.totalorder %s35, %s38
      %p47 = scmp.eq.s32.totalorder %s16, 1
      %p48 = por %p46, %p47
      %p49 = scmp.ne.s32.totalorder %s38, %s39
      %p50 = scmp.eq.s32.totalorder %s16, 0
      %p51 = por %p49, %p50
      %p52 = scmp.ne.s32.totalorder %s38, %s39
      %p53 = scmp.eq.s32.totalorder %s17, 1
      %p54 = por %p52, %p53
      %p56 = scmp.ne.s32.totalorder %s39, %s55
      %p57 = scmp.eq.s32.totalorder %s17, 0
      %p58 = por %p56, %p57
      %s60 = sadd.s32 %s59, 1
      %p63 = scmp.eq.s32.totalorder %s11, 1
      %p64 = scmp.ne.s32.totalorder %s59, %s61
      %p65 = scmp.eq.s32.totalorder %s11, 0
      %p66 = por %p64, %p65
      %p67 = scmp.ne.s32.totalorder %s59, %s61
      %p68 = scmp.eq.s32.totalorder %s16, 1
      %p69 = por %p67, %p68
      %p70 = scmp.ne.s32.totalorder %s61, %s62
      %p71 = scmp.eq.s32.totalorder %s16, 0
      %p72 = por %p70, %p71
      %p73 = scmp.ne.s32.totalorder %s61, %s62
      %p74 = scmp.eq.s32.totalorder %s17, 1
      %p75 = por %p73, %p74
      %p77 = scmp.ne.s32.totalorder %s62, %s76
      %p78 = scmp.eq.s32.totalorder %s17, 0
      %p79 = por %p77, %p78
      %s80 = ssub.s32 %s18, %s30
      %s81 = ssub.s32 %s19, %s26
      %s82 = sor.u32 %s80, %s81
      %p83 = scmp.eq.s32.totalorder %s82, 0
      %s85 = sadd.s32 %s84, 1
      %s86 = scalar_select %p83, %s84, %s85
      %p89 = pneg %p83
      %p90 = scmp.eq.s32.totalorder %s11, 1
      %p91 = por %p89, %p90
      %p92 = scmp.ne.s32.totalorder %s84, %s87
      %p93 = scmp.eq.s32.totalorder %s11, 0
      %p94 = por %p92, %p93
      %p95 = scmp.ne.s32.totalorder %s84, %s87
      %p96 = scmp.eq.s32.totalorder %s16, 1
      %p97 = por %p95, %p96
      %p98 = scmp.ne.s32.totalorder %s87, %s88
      %p99 = scmp.eq.s32.totalorder %s16, 0
      %p100 = por %p98, %p99
      %p101 = scmp.ne.s32.totalorder %s87, %s88
      %p102 = scmp.eq.s32.totalorder %s17, 1
      %p103 = por %p101, %p102
      %p105 = scmp.ne.s32.totalorder %s88, %s104
      %p106 = scmp.eq.s32.totalorder %s17, 0
      %p107 = por %p105, %p106
      %p108 = scmp.le.s32.totalorder 1, %s11
      %p109 = scmp.lt.s32.totalorder %s11, 3
      %p110 = pnand %p108, %p109
      %p111 = pneg %p110
      // Predicated region
      $region9: #{tpu_custom_call.1} parent=5 // pred_check
        _
      $region10: #{tpu_custom_call.1} parent=5 // pred_check_branch
        %113 = sbr.rel (%p110) target = $region12
      $region11: #{tpu_custom_call.1} parent=5 // pred_region
        %s114 = ssub.s32 %s11, 1
        // Predicated region
        $region13: #{tpu_custom_call.1} parent=11 // pred_check
          %p115 = pneg %p72
        $region14: #{tpu_custom_call.1} parent=11 // pred_check_branch
          %117 = sbr.rel (%p115) target = $region16
        $region15: #{tpu_custom_call.1} parent=11 // pred_region
          _
        $region16: #{tpu_custom_call.1} parent=11 // pred_fallthru
          _
      $region12: #{tpu_custom_call.1} parent=5 // pred_fallthru
        _
      %p118 = scmp.lt.s32.totalorder %s11, 2
      // Predicated region
      $region17: #{tpu_custom_call.1} parent=5 // pred_check
        %p119 = pneg %p118
      $region18: #{tpu_custom_call.1} parent=5 // pred_check_branch
        %121 = sbr.rel (%p119) target = $region20
      $region19: #{tpu_custom_call.1} parent=5 // pred_region
        // Predicated region
        $region21: #{tpu_custom_call.1} parent=19 // pred_check
          %p122 = pneg %p45
        $region22: #{tpu_custom_call.1} parent=19 // pred_check_branch
          %124 = sbr.rel (%p122) target = $region24
        $region23: #{tpu_custom_call.1} parent=19 // pred_region
          %s125 = smul.u32 4, %s19
          %p126 = scmp.lt.s32.totalorder %s18, 1
          %s127 = scalar_select %p126, %s18, 1
          %p128 = scmp.lt.s32.totalorder %s125, 3
          %s129 = scalar_select %p128, %s125, 3
          %s130 = smul.addr %s127, 4
          %s131 = sadd.s32 %s129, %s130
          %s132 = smul.addr %s131, 4
          %s133 = scalar_lea.vmem %s0, %s132
          %s134 = smul.u32 4, %s19
        $region24: #{tpu_custom_call.1} parent=19 // pred_fallthru
          _
      $region20: #{tpu_custom_call.1} parent=5 // pred_fallthru
        _
      %p135 = scmp.le.s32.totalorder 1, %s11
      %p136 = scmp.lt.s32.totalorder %s11, 3
      %p137 = pnand %p135, %p136
      %p138 = pneg %p137
      // Predicated region
      $region25: #{tpu_custom_call.1} parent=5 // pred_check
        _
      $region26: #{tpu_custom_call.1} parent=5 // pred_check_branch
        %140 = sbr.rel (%p137) target = $region28
      $region27: #{tpu_custom_call.1} parent=5 // pred_region
        %s141 = ssub.s32 %s11, 1
        %s142 = smul.u32 4, %s21
        %p143 = scmp.lt.s32.totalorder %s20, 1
        %s144 = scalar_select %p143, %s20, 1
        %p145 = scmp.lt.s32.totalorder %s142, 3
        %s146 = scalar_select %p145, %s142, 3
        %s147 = smul.addr %s144, 4
        %s148 = sadd.s32 %s146, %s147
        %s149 = smul.addr %s148, 4
        %s150 = scalar_lea.vmem %s0, %s149
        %p151 = pneg %p51
        %p152 = pneg %p48
        %p153 = pneg %p72
        %p154 = pneg %p69
        %p155 = pneg %p100
        %p156 = pneg %p97
        %s157 = sand.u32 %s87, 1
        %s158 = scalar_lea.sflag [#allocation3], %s157
        %s159 = sand.u32 %s87, 1
        %s160 = smul.addr %s159, 4
        %s161 = scalar_lea.vmem [#allocation2], %s160
        %s162 = smul.u32 4, %s21
        %p163 = scmp.lt.s32.totalorder %s20, 1
        %s164 = scalar_select %p163, %s20, 1
        %p165 = scmp.lt.s32.totalorder %s162, 3
        %s166 = scalar_select %p165, %s162, 3
        %s167 = smul.addr %s164, 4
        %s168 = sadd.s32 %s166, %s167
        %s169 = smul.addr %s168, 4
        %s170 = scalar_lea.vmem %s0, %s169
        %s171 = smul.u32 4, %s21
        %s172 = smul.u32 4, %s21
        %v173 = vld [vmem:[%s1] sm:$0xff]
        %v174 = vld [vmem:[%s1 + $0x8] sm:$0xff]
        %v175 = vld [vmem:[%s1 + $0x10] sm:$0xff]
        %v176 = vld [vmem:[%s1 + $0x18] sm:$0xff]
        %v177 = vld [vmem:[%s1 + $0x20] sm:$0xff]
        %v178 = vld [vmem:[%s170] sm:$0x77]
        %v179 = vld [vmem:[%s170 + $0x8] sm:$0x77]
        %181 = vset.pattern.permute.xlu0 4
        %182 = vperm.xlu0 %181, %v173
        %v183 = vpop.permute.xlu0 %182
        %v187 = vcombine.high %v178, %v178
        %v188 = vcombine.high %v179, %v179
        %vm189 = vcmask 23552
        %v190 = vsel %vm189, %v173, 0
        %vm192 = vcmask 1042432
        %v193 = vsel %vm192, %v178, 0
        %v195 = vsel %vm192, %v187, 0
        %v197 = vsel %vm192, %v179, 0
        %v199 = vsel %vm192, %v188, 0
        %201 = vmatprep.subr.mxu0 0.0
        %202 = vmatpush1.msra.mxu0 0.0
        %203 = vmatprep.subr.mxu0 0.0
        %204 = vmatpush1.msra.mxu0 0.0
        %205 = vmatprep.subr.mxu0 0.0
        %206 = vmatpush1.msra.mxu0 0.0
        %207 = vmatprep.subr.mxu0 0.0
        %208 = vmatpush1.msra.mxu0 0.0
        %209 = vmatprep.subr.mxu0 0.0
        %210 = vmatpush1.msra.mxu0 0.0
        %211 = vmatprep.subr.mxu0 0.0
        %212 = vmatpush1.msra.mxu0 0.0
        %213 = vmatprep.subr.mxu0 0.0
        %214 = vmatpush1.msra.mxu0 0.0
        %215 = vmatprep.subr.mxu0 0.0
        %216 = vmatpush1.msra.mxu0 0.0
        %217 = vmatprep.subr.mxu0 0.0
        %218 = vmatpush1.msra.mxu0 0.0
        %219 = vmatprep.subr.mxu0 0.0
        %220 = vmatpush1.msra.mxu0 0.0
        %221 = vmatprep.subr.mxu0 0.0
        %222 = vmatpush1.msra.mxu0 0.0
        %223 = vmatprep.subr.mxu0 0.0
        %224 = vmatpush1.msra.mxu0 0.0
        %225 = vmatprep.subr.mxu0 0.0
        %226 = vmatpush1.msra.mxu0 0.0
        %227 = vmatprep.subr.mxu0 0.0
        %228 = vmatpush1.msra.mxu0 0.0
        %229 = vmatprep.subr.mxu0 0.0
        %230 = vmatpush1.msra.mxu0 0.0
        %231 = vmatprep.subr.mxu0 %v195
        %232 = vmatpush1.msra.mxu0 %v193
        %233 = vmatprep.subr.mxu0 0.0
        %234 = vmatpush2.msra.mxu0 0.0
        %235 = vmatprep.subr.mxu0 0.0
        %236 = vmatpush2.msra.mxu0 0.0
        %237 = vmatprep.subr.mxu0 0.0
        %238 = vmatpush2.msra.mxu0 0.0
        %239 = vmatprep.subr.mxu0 0.0
        %240 = vmatpush2.msra.mxu0 0.0
        %241 = vmatprep.subr.mxu0 0.0
        %242 = vmatpush2.msra.mxu0 0.0
        %243 = vmatprep.subr.mxu0 0.0
        %244 = vmatpush2.msra.mxu0 0.0
        %245 = vmatprep.subr.mxu0 0.0
        %246 = vmatpush2.msra.mxu0 0.0
        %247 = vmatprep.subr.mxu0 0.0
        %248 = vmatpush2.msra.mxu0 0.0
        %249 = vmatprep.subr.mxu0 0.0
        %250 = vmatpush2.msra.mxu0 0.0
        %251 = vmatprep.subr.mxu0 0.0
        %252 = vmatpush2.msra.mxu0 0.0
        %253 = vmatprep.subr.mxu0 0.0
        %254 = vmatpush2.msra.mxu0 0.0
        %255 = vmatprep.subr.mxu0 0.0
        %256 = vmatpush2.msra.mxu0 0.0
        %257 = vmatprep.subr.mxu0 0.0
        %258 = vmatpush2.msra.mxu0 0.0
        %259 = vmatprep.subr.mxu0 0.0
        %260 = vmatpush2.msra.mxu0 0.0
        %261 = vmatprep.subr.mxu0 0.0
        %262 = vmatpush2.msra.mxu0 0.0
        %263 = vmatprep.subr.mxu0 0.0
        %264 = vmatpush2.msra.mxu0 0.0
        %265 = vmatprep.mubr.f32.mxu0 0.0
        %266 = vmatmul.mubr.f32.gmra.mxu0 %v190
        %v267 = vpop.f32.mrf.mxu0
        %v268 = vadd.f32 %v183, %v267
        %v269 = vpop.f32.mrf.mxu0
        %v270 = vadd.f32 %v183, %v269
        %271 = vdwg.mxu0
        %272 = vmatprep.subr.mxu0 0.0
        %273 = vmatpush1.msra.mxu0 0.0
        %274 = vmatprep.subr.mxu0 0.0
        %275 = vmatpush1.msra.mxu0 0.0
        %276 = vmatprep.subr.mxu0 0.0
        %277 = vmatpush1.msra.mxu0 0.0
        %278 = vmatprep.subr.mxu0 0.0
        %279 = vmatpush1.msra.mxu0 0.0
        %280 = vmatprep.subr.mxu0 0.0
        %281 = vmatpush1.msra.mxu0 0.0
        %282 = vmatprep.subr.mxu0 0.0
        %283 = vmatpush1.msra.mxu0 0.0
        %284 = vmatprep.subr.mxu0 0.0
        %285 = vmatpush1.msra.mxu0 0.0
        %286 = vmatprep.subr.mxu0 0.0
        %287 = vmatpush1.msra.mxu0 0.0
        %288 = vmatprep.subr.mxu0 0.0
        %289 = vmatpush1.msra.mxu0 0.0
        %290 = vmatprep.subr.mxu0 0.0
        %291 = vmatpush1.msra.mxu0 0.0
        %292 = vmatprep.subr.mxu0 0.0
        %293 = vmatpush1.msra.mxu0 0.0
        %294 = vmatprep.subr.mxu0 0.0
        %295 = vmatpush1.msra.mxu0 0.0
        %296 = vmatprep.subr.mxu0 0.0
        %297 = vmatpush1.msra.mxu0 0.0
        %298 = vmatprep.subr.mxu0 0.0
        %299 = vmatpush1.msra.mxu0 0.0
        %300 = vmatprep.subr.mxu0 0.0
        %301 = vmatpush1.msra.mxu0 0.0
        %302 = vmatprep.subr.mxu0 %v199
        %303 = vmatpush1.msra.mxu0 %v197
        %304 = vmatprep.subr.mxu0 0.0
        %305 = vmatpush2.msra.mxu0 0.0
        %306 = vmatprep.subr.mxu0 0.0
        %307 = vmatpush2.msra.mxu0 0.0
        %308 = vmatprep.subr.mxu0 0.0
        %309 = vmatpush2.msra.mxu0 0.0
        %310 = vmatprep.subr.mxu0 0.0
        %311 = vmatpush2.msra.mxu0 0.0
        %312 = vmatprep.subr.mxu0 0.0
        %313 = vmatpush2.msra.mxu0 0.0
        %314 = vmatprep.subr.mxu0 0.0
        %315 = vmatpush2.msra.mxu0 0.0
        %316 = vmatprep.subr.mxu0 0.0
        %317 = vmatpush2.msra.mxu0 0.0
        %318 = vmatprep.subr.mxu0 0.0
        %319 = vmatpush2.msra.mxu0 0.0
        %320 = vmatprep.subr.mxu0 0.0
        %321 = vmatpush2.msra.mxu0 0.0
        %322 = vmatprep.subr.mxu0 0.0
        %323 = vmatpush2.msra.mxu0 0.0
        %324 = vmatprep.subr.mxu0 0.0
        %325 = vmatpush2.msra.mxu0 0.0
        %326 = vmatprep.subr.mxu0 0.0
        %327 = vmatpush2.msra.mxu0 0.0
        %328 = vmatprep.subr.mxu0 0.0
        %329 = vmatpush2.msra.mxu0 0.0
        %330 = vmatprep.subr.mxu0 0.0
        %331 = vmatpush2.msra.mxu0 0.0
        %332 = vmatprep.subr.mxu0 0.0
        %333 = vmatpush2.msra.mxu0 0.0
        %334 = vmatprep.subr.mxu0 0.0
        %335 = vmatpush2.msra.mxu0 0.0
        %336 = vmatprep.mubr.f32.mxu0 0.0
        %337 = vmatmul.mubr.f32.gmra.mxu0 %v190
        %v338 = vpop.f32.mrf.mxu0
        %v339 = vadd.f32 %v183, %v338
        %v340 = vpop.f32.mrf.mxu0
        %v341 = vadd.f32 %v183, %v340
        %342 = vdwg.mxu0
        %v343 = vxor.u32 %v268, 2147483648
        %v344 = vxor.u32 %v270, 2147483648
        %v345 = vxor.u32 %v339, 2147483648
        %v346 = vxor.u32 %v341, 2147483648
        %v347 = vmul.f32 %v343, 1.442695
        %v348 = vpow.pop %v347
        %v349 = vmul.f32 %v344, 1.442695
        %v350 = vpow.pop %v349
        %v351 = vmul.f32 %v345, 1.442695
        %v352 = vpow.pop %v351
        %v353 = vmul.f32 %v346, 1.442695
        %v354 = vpow.pop %v353
        %v355 = vadd.f32 %v348, 1.0
        %v356 = vadd.f32 %v350, 1.0
        %v357 = vadd.f32 %v352, 1.0
        %v358 = vadd.f32 %v354, 1.0
        %v359 = vrcp.pop %v355
        %v360 = vmul.f32 1.0, %v359
        %v361 = vrcp.pop %v356
        %v362 = vmul.f32 1.0, %v361
        %v363 = vrcp.pop %v357
        %v364 = vmul.f32 1.0, %v363
        %v365 = vrcp.pop %v358
        %v366 = vmul.f32 1.0, %v365
        %368 = vset.pattern.permute.xlu0 8
        %369 = vperm.xlu0 %368, %v174
        %v370 = vpop.permute.xlu0 %369
        %373 = vset.pattern.permute.xlu0 8
        %374 = vperm.xlu0 %373, %v175
        %v375 = vpop.permute.xlu0 %374
        %378 = vset.pattern.permute.xlu0 8
        %379 = vperm.xlu0 %378, %v176
        %v380 = vpop.permute.xlu0 %379
        %383 = vset.pattern.permute.xlu0 8
        %384 = vperm.xlu0 %383, %v177
        %v385 = vpop.permute.xlu0 %384
        %vm387 = vcmask 48128
        %v388 = vsel %vm387, %v174, 0
        %v390 = vsel %vm387, %v175, 0
        %v392 = vsel %vm387, %v176, 0
        %v394 = vsel %vm387, %v177, 0
        %vm396 = vcmask 1045504
        %v398 = vsel %vm396, %v360, 0
        %v401 = vsel %vm396, %v362, 0
        %v404 = vsel %vm396, %v364, 0
        %v407 = vsel %vm396, %v366, 0
        %409 = vmatprep.subr.mxu0 0.0
        %410 = vmatpush1.msra.mxu0 0.0
        %411 = vmatprep.subr.mxu0 0.0
        %412 = vmatpush1.msra.mxu0 0.0
        %413 = vmatprep.subr.mxu0 0.0
        %414 = vmatpush1.msra.mxu0 0.0
        %415 = vmatprep.subr.mxu0 0.0
        %416 = vmatpush1.msra.mxu0 0.0
        %417 = vmatprep.subr.mxu0 0.0
        %418 = vmatpush1.msra.mxu0 0.0
        %419 = vmatprep.subr.mxu0 0.0
        %420 = vmatpush1.msra.mxu0 0.0
        %421 = vmatprep.subr.mxu0 0.0
        %422 = vmatpush1.msra.mxu0 0.0
        %423 = vmatprep.subr.mxu0 0.0
        %424 = vmatpush1.msra.mxu0 0.0
        %425 = vmatprep.subr.mxu0 0.0
        %426 = vmatpush1.msra.mxu0 0.0
        %427 = vmatprep.subr.mxu0 0.0
        %428 = vmatpush1.msra.mxu0 0.0
        %429 = vmatprep.subr.mxu0 0.0
        %430 = vmatpush1.msra.mxu0 0.0
        %431 = vmatprep.subr.mxu0 0.0
        %432 = vmatpush1.msra.mxu0 0.0
        %433 = vmatprep.subr.mxu0 0.0
        %434 = vmatpush1.msra.mxu0 0.0
        %435 = vmatprep.subr.mxu0 0.0
        %436 = vmatpush1.msra.mxu0 0.0
        %437 = vmatprep.subr.mxu0 0.0
        %438 = vmatpush1.msra.mxu0 0.0
        %439 = vmatprep.subr.mxu0 %v401
        %440 = vmatpush1.msra.mxu0 %v398
        %441 = vmatprep.subr.mxu0 0.0
        %442 = vmatpush2.msra.mxu0 0.0
        %443 = vmatprep.subr.mxu0 0.0
        %444 = vmatpush2.msra.mxu0 0.0
        %445 = vmatprep.subr.mxu0 0.0
        %446 = vmatpush2.msra.mxu0 0.0
        %447 = vmatprep.subr.mxu0 0.0
        %448 = vmatpush2.msra.mxu0 0.0
        %449 = vmatprep.subr.mxu0 0.0
        %450 = vmatpush2.msra.mxu0 0.0
        %451 = vmatprep.subr.mxu0 0.0
        %452 = vmatpush2.msra.mxu0 0.0
        %453 = vmatprep.subr.mxu0 0.0
        %454 = vmatpush2.msra.mxu0 0.0
        %455 = vmatprep.subr.mxu0 0.0
        %456 = vmatpush2.msra.mxu0 0.0
        %457 = vmatprep.subr.mxu0 0.0
        %458 = vmatpush2.msra.mxu0 0.0
        %459 = vmatprep.subr.mxu0 0.0
        %460 = vmatpush2.msra.mxu0 0.0
        %461 = vmatprep.subr.mxu0 0.0
        %462 = vmatpush2.msra.mxu0 0.0
        %463 = vmatprep.subr.mxu0 0.0
        %464 = vmatpush2.msra.mxu0 0.0
        %465 = vmatprep.subr.mxu0 0.0
        %466 = vmatpush2.msra.mxu0 0.0
        %467 = vmatprep.subr.mxu0 0.0
        %468 = vmatpush2.msra.mxu0 0.0
        %469 = vmatprep.subr.mxu0 0.0
        %470 = vmatpush2.msra.mxu0 0.0
        %471 = vmatprep.subr.mxu0 0.0
        %472 = vmatpush2.msra.mxu0 0.0
        %473 = vmatprep.mubr.f32.mxu0 0.0
        %474 = vmatmul.mubr.f32.gmra.mxu0 %v388
        %v475 = vpop.f32.mrf.mxu0
        %v476 = vadd.f32 %v370, %v475
        %v477 = vpop.f32.mrf.mxu0
        %v478 = vadd.f32 %v370, %v477
        %479 = vmatprep.mubr.f32.mxu0 0.0
        %480 = vmatmul.mubr.f32.gmra.mxu0 %v390
        %v481 = vpop.f32.mrf.mxu0
        %v482 = vadd.f32 %v375, %v481
        %v483 = vpop.f32.mrf.mxu0
        %v484 = vadd.f32 %v375, %v483
        %485 = vmatprep.mubr.f32.mxu0 0.0
        %486 = vmatmul.mubr.f32.gmra.mxu0 %v392
        %v487 = vpop.f32.mrf.mxu0
        %v488 = vadd.f32 %v380, %v487
        %v489 = vpop.f32.mrf.mxu0
        %v490 = vadd.f32 %v380, %v489
        %491 = vmatprep.mubr.f32.mxu0 0.0
        %492 = vmatmul.mubr.f32.gmra.mxu0 %v394
        %v493 = vpop.f32.mrf.mxu0
        %v494 = vadd.f32 %v385, %v493
        %v495 = vpop.f32.mrf.mxu0
        %v496 = vadd.f32 %v385, %v495
        %497 = vdwg.mxu0
        %498 = vmatprep.subr.mxu0 0.0
        %499 = vmatpush1.msra.mxu0 0.0
        %500 = vmatprep.subr.mxu0 0.0
        %501 = vmatpush1.msra.mxu0 0.0
        %502 = vmatprep.subr.mxu0 0.0
        %503 = vmatpush1.msra.mxu0 0.0
        %504 = vmatprep.subr.mxu0 0.0
        %505 = vmatpush1.msra.mxu0 0.0
        %506 = vmatprep.subr.mxu0 0.0
        %507 = vmatpush1.msra.mxu0 0.0
        %508 = vmatprep.subr.mxu0 0.0
        %509 = vmatpush1.msra.mxu0 0.0
        %510 = vmatprep.subr.mxu0 0.0
        %511 = vmatpush1.msra.mxu0 0.0
        %512 = vmatprep.subr.mxu0 0.0
        %513 = vmatpush1.msra.mxu0 0.0
        %514 = vmatprep.subr.mxu0 0.0
        %515 = vmatpush1.msra.mxu0 0.0
        %516 = vmatprep.subr.mxu0 0.0
        %517 = vmatpush1.msra.mxu0 0.0
        %518 = vmatprep.subr.mxu0 0.0
        %519 = vmatpush1.msra.mxu0 0.0
        %520 = vmatprep.subr.mxu0 0.0
        %521 = vmatpush1.msra.mxu0 0.0
        %522 = vmatprep.subr.mxu0 0.0
        %523 = vmatpush1.msra.mxu0 0.0
        %524 = vmatprep.subr.mxu0 0.0
        %525 = vmatpush1.msra.mxu0 0.0
        %526 = vmatprep.subr.mxu0 0.0
        %527 = vmatpush1.msra.mxu0 0.0
        %528 = vmatprep.subr.mxu0 %v407
        %529 = vmatpush1.msra.mxu0 %v404
        %530 = vmatprep.subr.mxu0 0.0
        %531 = vmatpush2.msra.mxu0 0.0
        %532 = vmatprep.subr.mxu0 0.0
        %533 = vmatpush2.msra.mxu0 0.0
        %534 = vmatprep.subr.mxu0 0.0
        %535 = vmatpush2.msra.mxu0 0.0
        %536 = vmatprep.subr.mxu0 0.0
        %537 = vmatpush2.msra.mxu0 0.0
        %538 = vmatprep.subr.mxu0 0.0
        %539 = vmatpush2.msra.mxu0 0.0
        %540 = vmatprep.subr.mxu0 0.0
        %541 = vmatpush2.msra.mxu0 0.0
        %542 = vmatprep.subr.mxu0 0.0
        %543 = vmatpush2.msra.mxu0 0.0
        %544 = vmatprep.subr.mxu0 0.0
        %545 = vmatpush2.msra.mxu0 0.0
        %546 = vmatprep.subr.mxu0 0.0
        %547 = vmatpush2.msra.mxu0 0.0
        %548 = vmatprep.subr.mxu0 0.0
        %549 = vmatpush2.msra.mxu0 0.0
        %550 = vmatprep.subr.mxu0 0.0
        %551 = vmatpush2.msra.mxu0 0.0
        %552 = vmatprep.subr.mxu0 0.0
        %553 = vmatpush2.msra.mxu0 0.0
        %554 = vmatprep.subr.mxu0 0.0
        %555 = vmatpush2.msra.mxu0 0.0
        %556 = vmatprep.subr.mxu0 0.0
        %557 = vmatpush2.msra.mxu0 0.0
        %558 = vmatprep.subr.mxu0 0.0
        %559 = vmatpush2.msra.mxu0 0.0
        %560 = vmatprep.subr.mxu0 0.0
        %561 = vmatpush2.msra.mxu0 0.0
        %562 = vmatprep.mubr.f32.mxu0 0.0
        %563 = vmatmul.mubr.f32.gmra.mxu0 %v388
        %v564 = vpop.f32.mrf.mxu0
        %v565 = vadd.f32 %v370, %v564
        %v566 = vpop.f32.mrf.mxu0
        %v567 = vadd.f32 %v370, %v566
        %568 = vmatprep.mubr.f32.mxu0 0.0
        %569 = vmatmul.mubr.f32.gmra.mxu0 %v390
        %v570 = vpop.f32.mrf.mxu0
        %v571 = vadd.f32 %v375, %v570
        %v572 = vpop.f32.mrf.mxu0
        %v573 = vadd.f32 %v375, %v572
        %574 = vmatprep.mubr.f32.mxu0 0.0
        %575 = vmatmul.mubr.f32.gmra.mxu0 %v392
        %v576 = vpop.f32.mrf.mxu0
        %v577 = vadd.f32 %v380, %v576
        %v578 = vpop.f32.mrf.mxu0
        %v579 = vadd.f32 %v380, %v578
        %580 = vmatprep.mubr.f32.mxu0 0.0
        %581 = vmatmul.mubr.f32.gmra.mxu0 %v394
        %v582 = vpop.f32.mrf.mxu0
        %v583 = vadd.f32 %v385, %v582
        %v584 = vpop.f32.mrf.mxu0
        %v585 = vadd.f32 %v385, %v584
        %586 = vdwg.mxu0
        %v587 = vmax.f32 %v476, 0.0
        %v588 = vmax.f32 %v478, 0.0
        %v589 = vmax.f32 %v565, 0.0
        %v590 = vmax.f32 %v567, 0.0
        %v591 = vmax.f32 %v482, 0.0
        %v592 = vmax.f32 %v484, 0.0
        %v593 = vmax.f32 %v571, 0.0
        %v594 = vmax.f32 %v573, 0.0
        %v595 = vmax.f32 %v488, 0.0
        %v596 = vmax.f32 %v490, 0.0
        %v597 = vmax.f32 %v577, 0.0
        %v598 = vmax.f32 %v579, 0.0
        %v599 = vmax.f32 %v494, 0.0
        %v600 = vmax.f32 %v496, 0.0
        %v601 = vmax.f32 %v583, 0.0
        %v602 = vmax.f32 %v585, 0.0
        %603 = vset.pattern.permute.xlu0 10
        %604 = vperm.xlu0 %603, %v174
        %v605 = vpop.permute.xlu0 %604
        %607 = vset.pattern.permute.xlu0 10
        %608 = vperm.xlu0 %607, %v175
        %v609 = vpop.permute.xlu0 %608
        %611 = vset.pattern.permute.xlu0 10
        %612 = vperm.xlu0 %611, %v176
        %v613 = vpop.permute.xlu0 %612
        %615 = vset.pattern.permute.xlu0 10
        %616 = vperm.xlu0 %615, %v177
        %v617 = vpop.permute.xlu0 %616
        %v619 = vmul.f32 %v605, %v587
        %v620 = vmul.f32 %v605, %v588
        %v621 = vmul.f32 %v605, %v589
        %v622 = vmul.f32 %v605, %v590
        %v623 = vmul.f32 %v609, %v591
        %v624 = vmul.f32 %v609, %v592
        %v625 = vmul.f32 %v609, %v593
        %v626 = vmul.f32 %v609, %v594
        %v627 = vmul.f32 %v613, %v595
        %v628 = vmul.f32 %v613, %v596
        %v629 = vmul.f32 %v613, %v597
        %v630 = vmul.f32 %v613, %v598
        %v631 = vmul.f32 %v617, %v599
        %v632 = vmul.f32 %v617, %v600
        %v633 = vmul.f32 %v617, %v601
        %v634 = vmul.f32 %v617, %v602
        %v635 = vadd.f32 %v619, %v623
        %v636 = vadd.f32 %v635, %v627
        %v637 = vadd.f32 %v636, %v631
        %v638 = vrot.slane %v637, 4
        %v639 = vadd.f32 %v637, %v638
        %v640 = vrot.slane %v639, 2
        %v641 = vadd.f32 %v639, %v640
        %v642 = vrot.slane %v641, 1
        %v643 = vadd.f32 %v641, %v642
        %v644 = vadd.f32 %v620, %v624
        %v645 = vadd.f32 %v644, %v628
        %v646 = vadd.f32 %v645, %v632
        %v647 = vrot.slane %v646, 4
        %v648 = vadd.f32 %v646, %v647
        %v649 = vrot.slane %v648, 2
        %v650 = vadd.f32 %v648, %v649
        %v651 = vrot.slane %v650, 1
        %v652 = vadd.f32 %v650, %v651
        %v653 = vadd.f32 %v621, %v625
        %v654 = vadd.f32 %v653, %v629
        %v655 = vadd.f32 %v654, %v633
        %v656 = vrot.slane %v655, 4
        %v657 = vadd.f32 %v655, %v656
        %v658 = vrot.slane %v657, 2
        %v659 = vadd.f32 %v657, %v658
        %v660 = vrot.slane %v659, 1
        %v661 = vadd.f32 %v659, %v660
        %v662 = vadd.f32 %v622, %v626
        %v663 = vadd.f32 %v662, %v630
        %v664 = vadd.f32 %v663, %v634
        %v665 = vrot.slane %v664, 4
        %v666 = vadd.f32 %v664, %v665
        %v667 = vrot.slane %v666, 2
        %v668 = vadd.f32 %v666, %v667
        %v669 = vrot.slane %v668, 1
        %v670 = vadd.f32 %v668, %v669
        %671 = vset.pattern.permute.xlu0 6
        %672 = vperm.xlu0 %671, %v173
        %v673 = vpop.permute.xlu0 %672
        %v675 = vadd.f32 %v643, %v673
        %v676 = vadd.f32 %v652, %v673
        %v677 = vadd.f32 %v661, %v673
        %v678 = vadd.f32 %v670, %v673
        %v679 = vxor.u32 %v675, 2147483648
        %v680 = vxor.u32 %v676, 2147483648
        %v681 = vxor.u32 %v677, 2147483648
        %v682 = vxor.u32 %v678, 2147483648
        %v683 = vmul.f32 %v679, 1.442695
        %v684 = vpow.pop %v683
        %v685 = vmul.f32 %v680, 1.442695
        %v686 = vpow.pop %v685
        %v687 = vmul.f32 %v681, 1.442695
        %v688 = vpow.pop %v687
        %v689 = vmul.f32 %v682, 1.442695
        %v690 = vpow.pop %v689
        %v691 = vadd.f32 %v684, 1.0
        %v692 = vadd.f32 %v686, 1.0
        %v693 = vadd.f32 %v688, 1.0
        %v694 = vadd.f32 %v690, 1.0
        %v695 = vrcp.pop %v691
        %v696 = vmul.f32 1.0, %v695
        %v697 = vrcp.pop %v692
        %v698 = vmul.f32 1.0, %v697
        %v699 = vrcp.pop %v693
        %v700 = vmul.f32 1.0, %v699
        %v701 = vrcp.pop %v694
        %v702 = vmul.f32 1.0, %v701
        %v707 = vcombine.low %v696, %v698
        %v708 = vcombine.low %v700, %v702
        %v710 = vunpack.c.l.s4 1966171168
        %v711 = vunpack.c.0.s8 %v710
        %v712 = vlaneseq
        %v713 = vshrl.u32 %v712, 7
        %v714 = vsub.s32 %v711, %v713
        %v715 = vrot.slane %v707, %v714
        %v717 = vunpack.c.l.s4 1966171168
        %v718 = vunpack.c.0.s8 %v717
        %v719 = vlaneseq
        %v720 = vshrl.u32 %v719, 7
        %v721 = vsub.s32 %v718, %v720
        %v722 = vrot.slane %v708, %v721
        %v723 = vcombine.low %v715, %v722
        %v725 = vunpack.c.l.s4 1966171168
        %v726 = vunpack.c.0.s8 %v725
        %v727 = vlaneseq
        %v728 = vshrl.u32 %v727, 7
        %v729 = vsub.s32 %v726, %v728
        %v730 = vrot.slane %v723, %v729
        %v732 = vlaneseq
        %vm733 = vcmp.ge.s32.totalorder %v732, 0
        %vm734 = vcmp.lt.s32.totalorder %v732, 512
        %vm735 = vmand %vm733, %vm734
        %736 = vst.msk [vmem:[%s161] sm:$0xf] %vm735, %v730
        %s737 = sand.u32 %s87, 1
        %s738 = scalar_lea.sflag [#allocation3], %s737
        %s739 = sand.u32 %s87, 1
        %s740 = smul.addr %s739, 4
        %s741 = scalar_lea.vmem [#allocation2], %s740
        // Predicated region
        $region29: #{tpu_custom_call.1} parent=27 // pred_check
          %p742 = pneg %p97
        $region30: #{tpu_custom_call.1} parent=27 // pred_check_branch
          %744 = sbr.rel (%p742) target = $region32
        $region31: #{tpu_custom_call.1} parent=27 // pred_region
          %s745 = smul.u32 4, %s21
          %s747 = ssub.s32 64, 64
          %748 = vsyncadd %s738, %s747
          %s749 = smul.addr %s20, 4
          %s750 = sadd.s32 %s745, %s749
          %s751 = smul.addr %s750, 16
          %s752 = scalar_lea.hbm %s2, %s751
          %s754 = sshll.u32 %s741, 4
          %s755 = int_to_ptr.vmem [resolvable:$true] %s754
          %757 = dma.vmem_to_hbm [thread:$0]  %s755, 64, %s752, %s738
        $region32: #{tpu_custom_call.1} parent=27 // pred_fallthru
          _
      $region28: #{tpu_custom_call.1} parent=5 // pred_fallthru
        _
      %p758 = scmp.le.s32.totalorder 2, %s11
      // Predicated region
      $region33: #{tpu_custom_call.1} parent=5 // pred_check
        %p759 = pneg %p758
      $region34: #{tpu_custom_call.1} parent=5 // pred_check_branch
        %761 = sbr.rel (%p759) target = $region36
      $region35: #{tpu_custom_call.1} parent=5 // pred_region
        %s762 = ssub.s32 %s11, 2
        // Predicated region
        $region37: #{tpu_custom_call.1} parent=35 // pred_check
          %p763 = pneg %p103
        $region38: #{tpu_custom_call.1} parent=35 // pred_check_branch
          %765 = sbr.rel (%p763) target = $region40
        $region39: #{tpu_custom_call.1} parent=35 // pred_region
          %s766 = sand.u32 %s88, 1
          %s767 = scalar_lea.sflag [#allocation3], %s766
          %s768 = sand.u32 %s88, 1
          %s769 = smul.addr %s768, 4
          %s770 = scalar_lea.vmem [#allocation2], %s769
          %771 = dma.done %s767, 64
        $region40: #{tpu_custom_call.1} parent=35 // pred_fallthru
          _
      $region36: #{tpu_custom_call.1} parent=5 // pred_fallthru
        _
    $region6: #{tpu_custom_call.1} parent=1 // loop_footer
      %s15 = sadd.s32 1, %s11
    $region7: #{tpu_custom_call.1} parent=1 // loop_footer_branch
      %10 = sbr.rel target = $region3
    $region8: #{tpu_custom_call.1} parent=1 // loop_exit
      _
    %772 = vsyncpa [#allocation3], 1
    %s773 = scalar_lea.sflag [#allocation3], 1
    %774 = vsyncpa %s773, 1

</llo_original>
